<compile_context>
chip_gen: v6e
topology: v6e:2x2x1
jax: 0.10.0
libtpu: 0.0.40
codegen_flags: <defaults>
</compile_context>

<pallas_src>
import jax
import jax.numpy as jnp
from jax.experimental import pallas as pl
from jax.experimental.pallas import tpu as pltpu


def _recurrent_branching_kernel(x_ref, wt_ref, b_ref, o_ref):
    x = x_ref[...].astype(jnp.float32)     # (B, F)
    wt = wt_ref[...].astype(jnp.float32)   # (F, F), already transposed (in, out)
    b = b_ref[...].astype(jnp.float32)     # (1, F) broadcast row

    # fc, then (branch-pow, fc) x 3 -- fully VMEM/vreg resident.
    x = jnp.dot(x, wt, preferred_element_type=jnp.float32) + b
    for _ in range(3):
        x1 = x + 1.0
        x2 = x * 2.0
        x = jnp.power(x1, x2)
        x = jnp.dot(x, wt, preferred_element_type=jnp.float32) + b

    o_ref[...] = x.astype(o_ref.dtype)


def recurrent_with_branching(x, weight, bias):
    """x: (B, 5) float; weight: (5, 5) [out, in]; bias: (5,). Returns (B, 5)."""
    B, F = x.shape

    # Tiny, fusable layout prep only (no padding, no output slicing).
    x32 = x.astype(jnp.float32)
    wt = weight.T.astype(jnp.float32)          # (in, out)
    b = bias.reshape(1, F).astype(jnp.float32)

    vmem = pl.BlockSpec(memory_space=pltpu.MemorySpace.VMEM)
    cost = pl.CostEstimate(
        flops=4 * 2 * B * F * F,            # 4 matmuls
        transcendentals=3 * 2 * B * F,      # 3 pow branches (exp + log each)
        bytes_accessed=4 * (B * F + F * F + F + B * F),
    )

    out = pl.pallas_call(
        _recurrent_branching_kernel,
        out_shape=jax.ShapeDtypeStruct((B, F), jnp.float32),
        in_specs=[vmem, vmem, vmem],
        out_specs=vmem,
        cost_estimate=cost,
    )(x32, wt, b)
    return out.astype(x.dtype)


def _reference(x, weight, bias):
    x = x.astype(jnp.float32)
    wt = weight.T.astype(jnp.float32)
    b = bias.astype(jnp.float32)
    x = x @ wt + b
    for _ in range(3):
        x = jnp.power(x + 1.0, x * 2.0)
        x = x @ wt + b
    return x


if __name__ == "__main__":
    key = jax.random.PRNGKey(0)
    kx, kw, kb = jax.random.split(key, 3)
    B, F = 8, 5
    # Small-scale init keeps the (x+1)**(2x) branches in a well-conditioned,
    # positive-base regime (same forward semantics; just a benign parameter choice).
    x = 0.3 * jax.random.normal(kx, (B, F), dtype=jnp.float32)
    weight = 0.05 * jax.random.normal(kw, (F, F), dtype=jnp.float32)
    bias = 0.05 * jax.random.normal(kb, (F,), dtype=jnp.float32)

    y = recurrent_with_branching(x, weight, bias)
    jax.block_until_ready(y)

    y_ref = _reference(x, weight, bias)
    assert y.shape == (B, F)
    assert jnp.allclose(y, y_ref, atol=1e-5, rtol=1e-4, equal_nan=True), (
        "mismatch vs reference: max abs err "
        f"{float(jnp.max(jnp.abs(y - y_ref)))}"
    )
    print("KERNEL_OK")
</pallas_src>

<mosaic_0001>
module attributes {stable_mosaic.version = 11 : i64} {
  func.func @_recurrent_branching_kernel(%arg0: memref<8x5xf32, #tpu.memory_space<vmem>>, %arg1: memref<5x5xf32, #tpu.memory_space<vmem>>, %arg2: memref<1x5xf32, #tpu.memory_space<vmem>>, %arg3: memref<8x5xf32, #tpu.memory_space<vmem>>) attributes {dimension_semantics = [], scalar_prefetch = 0 : i64, scratch_operands = 0 : i64, tpu.core_type = #tpu.core_type<tc>} {
    %c0 = arith.constant 0 : index
    %c0_0 = arith.constant 0 : index
    %0 = vector.load %arg0[%c0, %c0_0] : memref<8x5xf32, #tpu.memory_space<vmem>>, vector<8x5xf32>
    %c0_1 = arith.constant 0 : index
    %c0_2 = arith.constant 0 : index
    %1 = vector.load %arg1[%c0_1, %c0_2] : memref<5x5xf32, #tpu.memory_space<vmem>>, vector<5x5xf32>
    %c0_3 = arith.constant 0 : index
    %c0_4 = arith.constant 0 : index
    %2 = vector.load %arg2[%c0_3, %c0_4] : memref<1x5xf32, #tpu.memory_space<vmem>>, vector<1x5xf32>
    %cst = arith.constant dense<0.000000e+00> : vector<8x5xf32>
    %3 = tpu.matmul %0, %1, %cst {dimension_numbers = #tpu.dot_dimension_numbers<[1], [0], [0], [1], [0, 0, 1, 1], [], []>} : vector<8x5xf32>, vector<5x5xf32>, vector<8x5xf32> -> vector<8x5xf32>
    %4 = vector.broadcast %2 : vector<1x5xf32> to vector<8x5xf32>
    %5 = arith.addf %3, %4 : vector<8x5xf32>
    %cst_5 = arith.constant 1.000000e+00 : f32
    %6 = vector.broadcast %cst_5 : f32 to vector<8x5xf32>
    %7 = arith.addf %5, %6 : vector<8x5xf32>
    %cst_6 = arith.constant 2.000000e+00 : f32
    %8 = vector.broadcast %cst_6 : f32 to vector<8x5xf32>
    %9 = arith.mulf %5, %8 : vector<8x5xf32>
    %10 = math.powf %7, %9 : vector<8x5xf32>
    %cst_7 = arith.constant dense<0.000000e+00> : vector<8x5xf32>
    %11 = tpu.matmul %10, %1, %cst_7 {dimension_numbers = #tpu.dot_dimension_numbers<[1], [0], [0], [1], [0, 0, 1, 1], [], []>} : vector<8x5xf32>, vector<5x5xf32>, vector<8x5xf32> -> vector<8x5xf32>
    %12 = vector.broadcast %2 : vector<1x5xf32> to vector<8x5xf32>
    %13 = arith.addf %11, %12 : vector<8x5xf32>
    %cst_8 = arith.constant 1.000000e+00 : f32
    %14 = vector.broadcast %cst_8 : f32 to vector<8x5xf32>
    %15 = arith.addf %13, %14 : vector<8x5xf32>
    %cst_9 = arith.constant 2.000000e+00 : f32
    %16 = vector.broadcast %cst_9 : f32 to vector<8x5xf32>
    %17 = arith.mulf %13, %16 : vector<8x5xf32>
    %18 = math.powf %15, %17 : vector<8x5xf32>
    %cst_10 = arith.constant dense<0.000000e+00> : vector<8x5xf32>
    %19 = tpu.matmul %18, %1, %cst_10 {dimension_numbers = #tpu.dot_dimension_numbers<[1], [0], [0], [1], [0, 0, 1, 1], [], []>} : vector<8x5xf32>, vector<5x5xf32>, vector<8x5xf32> -> vector<8x5xf32>
    %20 = vector.broadcast %2 : vector<1x5xf32> to vector<8x5xf32>
    %21 = arith.addf %19, %20 : vector<8x5xf32>
    %cst_11 = arith.constant 1.000000e+00 : f32
    %22 = vector.broadcast %cst_11 : f32 to vector<8x5xf32>
    %23 = arith.addf %21, %22 : vector<8x5xf32>
    %cst_12 = arith.constant 2.000000e+00 : f32
    %24 = vector.broadcast %cst_12 : f32 to vector<8x5xf32>
    %25 = arith.mulf %21, %24 : vector<8x5xf32>
    %26 = math.powf %23, %25 : vector<8x5xf32>
    %cst_13 = arith.constant dense<0.000000e+00> : vector<8x5xf32>
    %27 = tpu.matmul %26, %1, %cst_13 {dimension_numbers = #tpu.dot_dimension_numbers<[1], [0], [0], [1], [0, 0, 1, 1], [], []>} : vector<8x5xf32>, vector<5x5xf32>, vector<8x5xf32> -> vector<8x5xf32>
    %28 = vector.broadcast %2 : vector<1x5xf32> to vector<8x5xf32>
    %29 = arith.addf %27, %28 : vector<8x5xf32>
    %c0_14 = arith.constant 0 : index
    %c0_15 = arith.constant 0 : index
    %30 = vector.load %arg3[%c0_14, %c0_15] : memref<8x5xf32, #tpu.memory_space<vmem>>, vector<8x5xf32>
    tpu.vector_store %arg3[%c0_14, %c0_15], %29 {strides = array<i32>} : memref<8x5xf32, #tpu.memory_space<vmem>>, vector<8x5xf32>,
    return
  }
}

</mosaic_0001>

<llo_original>
// kernel: tpu_custom_call.1
$region0: #{tpu_custom_call.1}
  #allocation0 [shape = 'u32[]', space=smem, size = 0x4, offset = 0x4, fixed_abs, tag = 'smem constant byte address 0x4 - core index']
  #allocation1 [shape = 'u32[144,128]{1,0:T(1,128)}', space=vmem, size = 0x12000, scoped, tag = 'internal scratch']
  %s0 = inlined_call_operand.hbm [shape: f32[8,5], index: 0, kind: input, shape index: {}]
  %s1 = inlined_call_operand.hbm [shape: f32[5,5], index: 1, kind: input, shape index: {}]
  %s2 = inlined_call_operand.vmem [shape: f32[1,5], index: 2, kind: input, shape index: {}]
  %s3 = inlined_call_operand.hbm [shape: f32[8,5], index: 3, kind: output, shape index: {}]
  %s4 = sld [smem:[#allocation0]]
  $region30: #{tpu_custom_call.1} parent=0
    _
  %s6 = ssub.s32 1, %s4
  %s7 = scalar_select 0, %s6, %s4
  $region1: #{tpu_custom_call.1} parent=0
    #allocation2 [shape = 'u8[4096]{0}', space=vmem, size = 0x1000, scoped, tag = 'input window, operand 0, single buffered']
    #allocation3 [shape = 's32[1]{0}', space=sflag, size = 0x4, scoped, tag = 'scoped memory for tpu_custom_call.1']
    #allocation4 [shape = 's32[1]{0}', space=sflag, size = 0x4, scoped, tag = 'scoped memory for tpu_custom_call.1']
    #allocation5 [shape = 'u8[4096]{0}', space=vmem, size = 0x1000, scoped, tag = 'input window, operand 1, single buffered']
    #allocation6 [shape = 's32[1]{0}', space=sflag, size = 0x4, scoped, tag = 'scoped memory for tpu_custom_call.1']
    #allocation7 [shape = 'u8[4096]{0}', space=vmem, size = 0x1000, scoped, tag = 'output window, operand 0, single buffered']
    %8 = vsyncpa [#allocation3], 0
    %9 = vsyncpa [#allocation6], 0
    %10 = vsyncpa [#allocation4], 0
    // Predicated region
    $region2: #{tpu_custom_call.1} parent=1 // pred_check
      _
    $region3: #{tpu_custom_call.1} parent=1 // pred_check_branch
      %12 = sbr.rel (0) target = $region5
    $region4: #{tpu_custom_call.1} parent=1 // pred_region
      %s14 = ssub.s32 128, 128
      %15 = vsyncadd [#allocation3], %s14
      %s17 = sshll.u32 [#allocation2], 4
      %s18 = int_to_ptr.vmem [resolvable:$true] %s17
      %20 = dma.hbm_to_vmem [thread:$0]  %s0, 128, %s18, [#allocation3]
    $region5: #{tpu_custom_call.1} parent=1 // pred_fallthru
      _
    // Predicated region
    $region6: #{tpu_custom_call.1} parent=1 // pred_check
      _
    $region7: #{tpu_custom_call.1} parent=1 // pred_check_branch
      %22 = sbr.rel (0) target = $region9
    $region8: #{tpu_custom_call.1} parent=1 // pred_region
      %s24 = ssub.s32 128, 128
      %25 = vsyncadd [#allocation6], %s24
      %s27 = sshll.u32 [#allocation5], 4
      %s28 = int_to_ptr.vmem [resolvable:$true] %s27
      %30 = dma.hbm_to_vmem [thread:$0]  %s1, 128, %s28, [#allocation6]
    $region9: #{tpu_custom_call.1} parent=1 // pred_fallthru
      _
    // Predicated region
    $region10: #{tpu_custom_call.1} parent=1 // pred_check
      _
    $region11: #{tpu_custom_call.1} parent=1 // pred_check_branch
      %32 = sbr.rel (0) target = $region13
    $region12: #{tpu_custom_call.1} parent=1 // pred_region
      _
    $region13: #{tpu_custom_call.1} parent=1 // pred_fallthru
      _
    // Predicated region
    $region14: #{tpu_custom_call.1} parent=1 // pred_check
      _
    $region15: #{tpu_custom_call.1} parent=1 // pred_check_branch
      %34 = sbr.rel (0) target = $region17
    $region16: #{tpu_custom_call.1} parent=1 // pred_region
      %35 = dma.done [#allocation3], 128
    $region17: #{tpu_custom_call.1} parent=1 // pred_fallthru
      _
    // Predicated region
    $region18: #{tpu_custom_call.1} parent=1 // pred_check
      _
    $region19: #{tpu_custom_call.1} parent=1 // pred_check_branch
      %37 = sbr.rel (0) target = $region21
    $region20: #{tpu_custom_call.1} parent=1 // pred_region
      %38 = dma.done [#allocation6], 128
    $region21: #{tpu_custom_call.1} parent=1 // pred_fallthru
      _
    %v39 = vld [vmem:[#allocation2] sm:$0xff]
    %v40 = vld [vmem:[#allocation5] sm:$0x1f]
    %v41 = vld [vmem:[%s2] sm:$0x1]
    %v43 = vlaneseq
    %v44 = vshrl.u32 %v43, 7
    %v45 = vsub.s32 0, %v44
    %v46 = vrot.slane %v41, %v45
    %vm48 = vcmask 39936
    %v50 = vsel %vm48, %v39, 0
    %vm52 = vcmask 1044480
    %v54 = vsel %vm52, %v40, 0
    %56 = vmatprep.subr.mxu0 0.0
    %57 = vmatpush1.msra.mxu0 0.0
    %58 = vmatprep.subr.mxu0 0.0
    %59 = vmatpush1.msra.mxu0 0.0
    %60 = vmatprep.subr.mxu0 0.0
    %61 = vmatpush1.msra.mxu0 0.0
    %62 = vmatprep.subr.mxu0 0.0
    %63 = vmatpush1.msra.mxu0 0.0
    %64 = vmatprep.subr.mxu0 0.0
    %65 = vmatpush1.msra.mxu0 0.0
    %66 = vmatprep.subr.mxu0 0.0
    %67 = vmatpush1.msra.mxu0 0.0
    %68 = vmatprep.subr.mxu0 0.0
    %69 = vmatpush1.msra.mxu0 0.0
    %70 = vmatprep.subr.mxu0 0.0
    %71 = vmatpush1.msra.mxu0 0.0
    %72 = vmatprep.subr.mxu0 0.0
    %73 = vmatpush1.msra.mxu0 0.0
    %74 = vmatprep.subr.mxu0 0.0
    %75 = vmatpush1.msra.mxu0 0.0
    %76 = vmatprep.subr.mxu0 0.0
    %77 = vmatpush1.msra.mxu0 0.0
    %78 = vmatprep.subr.mxu0 0.0
    %79 = vmatpush1.msra.mxu0 0.0
    %80 = vmatprep.subr.mxu0 0.0
    %81 = vmatpush1.msra.mxu0 0.0
    %82 = vmatprep.subr.mxu0 0.0
    %83 = vmatpush1.msra.mxu0 0.0
    %84 = vmatprep.subr.mxu0 0.0
    %85 = vmatpush1.msra.mxu0 0.0
    %86 = vmatprep.subr.mxu0 0.0
    %87 = vmatpush1.msra.mxu0 %v54
    %88 = vmatprep.subr.mxu0 0.0
    %89 = vmatpush2.msra.mxu0 0.0
    %90 = vmatprep.subr.mxu0 0.0
    %91 = vmatpush2.msra.mxu0 0.0
    %92 = vmatprep.subr.mxu0 0.0
    %93 = vmatpush2.msra.mxu0 0.0
    %94 = vmatprep.subr.mxu0 0.0
    %95 = vmatpush2.msra.mxu0 0.0
    %96 = vmatprep.subr.mxu0 0.0
    %97 = vmatpush2.msra.mxu0 0.0
    %98 = vmatprep.subr.mxu0 0.0
    %99 = vmatpush2.msra.mxu0 0.0
    %100 = vmatprep.subr.mxu0 0.0
    %101 = vmatpush2.msra.mxu0 0.0
    %102 = vmatprep.subr.mxu0 0.0
    %103 = vmatpush2.msra.mxu0 0.0
    %104 = vmatprep.subr.mxu0 0.0
    %105 = vmatpush2.msra.mxu0 0.0
    %106 = vmatprep.subr.mxu0 0.0
    %107 = vmatpush2.msra.mxu0 0.0
    %108 = vmatprep.subr.mxu0 0.0
    %109 = vmatpush2.msra.mxu0 0.0
    %110 = vmatprep.subr.mxu0 0.0
    %111 = vmatpush2.msra.mxu0 0.0
    %112 = vmatprep.subr.mxu0 0.0
    %113 = vmatpush2.msra.mxu0 0.0
    %114 = vmatprep.subr.mxu0 0.0
    %115 = vmatpush2.msra.mxu0 0.0
    %116 = vmatprep.subr.mxu0 0.0
    %117 = vmatpush2.msra.mxu0 0.0
    %118 = vmatprep.subr.mxu0 0.0
    %119 = vmatpush2.msra.mxu0 0.0
    %120 = vmatprep.mubr.f32.mxu0 0.0
    %121 = vmatmul.mubr.f32.gmra.mxu0 %v50
    %v122 = vpop.f32.mrf.mxu0
    %v123 = vadd.f32 %v46, %v122
    %v124 = vpop.f32.mrf.mxu0
    %125 = vdwg.mxu0
    %v126 = vadd.f32 %v123, 1.0
    %v127 = vmul.f32 %v123, 2.0
    %v128 = vpow.f32 %v126, %v127
    %v130 = vsel %vm48, %v128, 0
    %132 = vmatprep.subr.mxu0 0.0
    %133 = vmatpush1.msra.mxu0 0.0
    %134 = vmatprep.subr.mxu0 0.0
    %135 = vmatpush1.msra.mxu0 0.0
    %136 = vmatprep.subr.mxu0 0.0
    %137 = vmatpush1.msra.mxu0 0.0
    %138 = vmatprep.subr.mxu0 0.0
    %139 = vmatpush1.msra.mxu0 0.0
    %140 = vmatprep.subr.mxu0 0.0
    %141 = vmatpush1.msra.mxu0 0.0
    %142 = vmatprep.subr.mxu0 0.0
    %143 = vmatpush1.msra.mxu0 0.0
    %144 = vmatprep.subr.mxu0 0.0
    %145 = vmatpush1.msra.mxu0 0.0
    %146 = vmatprep.subr.mxu0 0.0
    %147 = vmatpush1.msra.mxu0 0.0
    %148 = vmatprep.subr.mxu0 0.0
    %149 = vmatpush1.msra.mxu0 0.0
    %150 = vmatprep.subr.mxu0 0.0
    %151 = vmatpush1.msra.mxu0 0.0
    %152 = vmatprep.subr.mxu0 0.0
    %153 = vmatpush1.msra.mxu0 0.0
    %154 = vmatprep.subr.mxu0 0.0
    %155 = vmatpush1.msra.mxu0 0.0
    %156 = vmatprep.subr.mxu0 0.0
    %157 = vmatpush1.msra.mxu0 0.0
    %158 = vmatprep.subr.mxu0 0.0
    %159 = vmatpush1.msra.mxu0 0.0
    %160 = vmatprep.subr.mxu0 0.0
    %161 = vmatpush1.msra.mxu0 0.0
    %162 = vmatprep.subr.mxu0 0.0
    %163 = vmatpush1.msra.mxu0 %v54
    %164 = vmatprep.subr.mxu0 0.0
    %165 = vmatpush2.msra.mxu0 0.0
    %166 = vmatprep.subr.mxu0 0.0
    %167 = vmatpush2.msra.mxu0 0.0
    %168 = vmatprep.subr.mxu0 0.0
    %169 = vmatpush2.msra.mxu0 0.0
    %170 = vmatprep.subr.mxu0 0.0
    %171 = vmatpush2.msra.mxu0 0.0
    %172 = vmatprep.subr.mxu0 0.0
    %173 = vmatpush2.msra.mxu0 0.0
    %174 = vmatprep.subr.mxu0 0.0
    %175 = vmatpush2.msra.mxu0 0.0
    %176 = vmatprep.subr.mxu0 0.0
    %177 = vmatpush2.msra.mxu0 0.0
    %178 = vmatprep.subr.mxu0 0.0
    %179 = vmatpush2.msra.mxu0 0.0
    %180 = vmatprep.subr.mxu0 0.0
    %181 = vmatpush2.msra.mxu0 0.0
    %182 = vmatprep.subr.mxu0 0.0
    %183 = vmatpush2.msra.mxu0 0.0
    %184 = vmatprep.subr.mxu0 0.0
    %185 = vmatpush2.msra.mxu0 0.0
    %186 = vmatprep.subr.mxu0 0.0
    %187 = vmatpush2.msra.mxu0 0.0
    %188 = vmatprep.subr.mxu0 0.0
    %189 = vmatpush2.msra.mxu0 0.0
    %190 = vmatprep.subr.mxu0 0.0
    %191 = vmatpush2.msra.mxu0 0.0
    %192 = vmatprep.subr.mxu0 0.0
    %193 = vmatpush2.msra.mxu0 0.0
    %194 = vmatprep.subr.mxu0 0.0
    %195 = vmatpush2.msra.mxu0 0.0
    %196 = vmatprep.mubr.f32.mxu0 0.0
    %197 = vmatmul.mubr.f32.gmra.mxu0 %v130
    %v198 = vpop.f32.mrf.mxu0
    %v199 = vadd.f32 %v46, %v198
    %v200 = vpop.f32.mrf.mxu0
    %201 = vdwg.mxu0
    %v202 = vadd.f32 %v199, 1.0
    %v203 = vmul.f32 %v199, 2.0
    %v204 = vpow.f32 %v202, %v203
    %v206 = vsel %vm48, %v204, 0
    %208 = vmatprep.subr.mxu0 0.0
    %209 = vmatpush1.msra.mxu0 0.0
    %210 = vmatprep.subr.mxu0 0.0
    %211 = vmatpush1.msra.mxu0 0.0
    %212 = vmatprep.subr.mxu0 0.0
    %213 = vmatpush1.msra.mxu0 0.0
    %214 = vmatprep.subr.mxu0 0.0
    %215 = vmatpush1.msra.mxu0 0.0
    %216 = vmatprep.subr.mxu0 0.0
    %217 = vmatpush1.msra.mxu0 0.0
    %218 = vmatprep.subr.mxu0 0.0
    %219 = vmatpush1.msra.mxu0 0.0
    %220 = vmatprep.subr.mxu0 0.0
    %221 = vmatpush1.msra.mxu0 0.0
    %222 = vmatprep.subr.mxu0 0.0
    %223 = vmatpush1.msra.mxu0 0.0
    %224 = vmatprep.subr.mxu0 0.0
    %225 = vmatpush1.msra.mxu0 0.0
    %226 = vmatprep.subr.mxu0 0.0
    %227 = vmatpush1.msra.mxu0 0.0
    %228 = vmatprep.subr.mxu0 0.0
    %229 = vmatpush1.msra.mxu0 0.0
    %230 = vmatprep.subr.mxu0 0.0
    %231 = vmatpush1.msra.mxu0 0.0
    %232 = vmatprep.subr.mxu0 0.0
    %233 = vmatpush1.msra.mxu0 0.0
    %234 = vmatprep.subr.mxu0 0.0
    %235 = vmatpush1.msra.mxu0 0.0
    %236 = vmatprep.subr.mxu0 0.0
    %237 = vmatpush1.msra.mxu0 0.0
    %238 = vmatprep.subr.mxu0 0.0
    %239 = vmatpush1.msra.mxu0 %v54
    %240 = vmatprep.subr.mxu0 0.0
    %241 = vmatpush2.msra.mxu0 0.0
    %242 = vmatprep.subr.mxu0 0.0
    %243 = vmatpush2.msra.mxu0 0.0
    %244 = vmatprep.subr.mxu0 0.0
    %245 = vmatpush2.msra.mxu0 0.0
    %246 = vmatprep.subr.mxu0 0.0
    %247 = vmatpush2.msra.mxu0 0.0
    %248 = vmatprep.subr.mxu0 0.0
    %249 = vmatpush2.msra.mxu0 0.0
    %250 = vmatprep.subr.mxu0 0.0
    %251 = vmatpush2.msra.mxu0 0.0
    %252 = vmatprep.subr.mxu0 0.0
    %253 = vmatpush2.msra.mxu0 0.0
    %254 = vmatprep.subr.mxu0 0.0
    %255 = vmatpush2.msra.mxu0 0.0
    %256 = vmatprep.subr.mxu0 0.0
    %257 = vmatpush2.msra.mxu0 0.0
    %258 = vmatprep.subr.mxu0 0.0
    %259 = vmatpush2.msra.mxu0 0.0
    %260 = vmatprep.subr.mxu0 0.0
    %261 = vmatpush2.msra.mxu0 0.0
    %262 = vmatprep.subr.mxu0 0.0
    %263 = vmatpush2.msra.mxu0 0.0
    %264 = vmatprep.subr.mxu0 0.0
    %265 = vmatpush2.msra.mxu0 0.0
    %266 = vmatprep.subr.mxu0 0.0
    %267 = vmatpush2.msra.mxu0 0.0
    %268 = vmatprep.subr.mxu0 0.0
    %269 = vmatpush2.msra.mxu0 0.0
    %270 = vmatprep.subr.mxu0 0.0
    %271 = vmatpush2.msra.mxu0 0.0
    %272 = vmatprep.mubr.f32.mxu0 0.0
    %273 = vmatmul.mubr.f32.gmra.mxu0 %v206
    %v274 = vpop.f32.mrf.mxu0
    %v275 = vadd.f32 %v46, %v274
    %v276 = vpop.f32.mrf.mxu0
    %277 = vdwg.mxu0
    %v278 = vadd.f32 %v275, 1.0
    %v279 = vmul.f32 %v275, 2.0
    %v280 = vpow.f32 %v278, %v279
    %v282 = vsel %vm48, %v280, 0
    %284 = vmatprep.subr.mxu0 0.0
    %285 = vmatpush1.msra.mxu0 0.0
    %286 = vmatprep.subr.mxu0 0.0
    %287 = vmatpush1.msra.mxu0 0.0
    %288 = vmatprep.subr.mxu0 0.0
    %289 = vmatpush1.msra.mxu0 0.0
    %290 = vmatprep.subr.mxu0 0.0
    %291 = vmatpush1.msra.mxu0 0.0
    %292 = vmatprep.subr.mxu0 0.0
    %293 = vmatpush1.msra.mxu0 0.0
    %294 = vmatprep.subr.mxu0 0.0
    %295 = vmatpush1.msra.mxu0 0.0
    %296 = vmatprep.subr.mxu0 0.0
    %297 = vmatpush1.msra.mxu0 0.0
    %298 = vmatprep.subr.mxu0 0.0
    %299 = vmatpush1.msra.mxu0 0.0
    %300 = vmatprep.subr.mxu0 0.0
    %301 = vmatpush1.msra.mxu0 0.0
    %302 = vmatprep.subr.mxu0 0.0
    %303 = vmatpush1.msra.mxu0 0.0
    %304 = vmatprep.subr.mxu0 0.0
    %305 = vmatpush1.msra.mxu0 0.0
    %306 = vmatprep.subr.mxu0 0.0
    %307 = vmatpush1.msra.mxu0 0.0
    %308 = vmatprep.subr.mxu0 0.0
    %309 = vmatpush1.msra.mxu0 0.0
    %310 = vmatprep.subr.mxu0 0.0
    %311 = vmatpush1.msra.mxu0 0.0
    %312 = vmatprep.subr.mxu0 0.0
    %313 = vmatpush1.msra.mxu0 0.0
    %314 = vmatprep.subr.mxu0 0.0
    %315 = vmatpush1.msra.mxu0 %v54
    %316 = vmatprep.subr.mxu0 0.0
    %317 = vmatpush2.msra.mxu0 0.0
    %318 = vmatprep.subr.mxu0 0.0
    %319 = vmatpush2.msra.mxu0 0.0
    %320 = vmatprep.subr.mxu0 0.0
    %321 = vmatpush2.msra.mxu0 0.0
    %322 = vmatprep.subr.mxu0 0.0
    %323 = vmatpush2.msra.mxu0 0.0
    %324 = vmatprep.subr.mxu0 0.0
    %325 = vmatpush2.msra.mxu0 0.0
    %326 = vmatprep.subr.mxu0 0.0
    %327 = vmatpush2.msra.mxu0 0.0
    %328 = vmatprep.subr.mxu0 0.0
    %329 = vmatpush2.msra.mxu0 0.0
    %330 = vmatprep.subr.mxu0 0.0
    %331 = vmatpush2.msra.mxu0 0.0
    %332 = vmatprep.subr.mxu0 0.0
    %333 = vmatpush2.msra.mxu0 0.0
    %334 = vmatprep.subr.mxu0 0.0
    %335 = vmatpush2.msra.mxu0 0.0
    %336 = vmatprep.subr.mxu0 0.0
    %337 = vmatpush2.msra.mxu0 0.0
    %338 = vmatprep.subr.mxu0 0.0
    %339 = vmatpush2.msra.mxu0 0.0
    %340 = vmatprep.subr.mxu0 0.0
    %341 = vmatpush2.msra.mxu0 0.0
    %342 = vmatprep.subr.mxu0 0.0
    %343 = vmatpush2.msra.mxu0 0.0
    %344 = vmatprep.subr.mxu0 0.0
    %345 = vmatpush2.msra.mxu0 0.0
    %346 = vmatprep.subr.mxu0 0.0
    %347 = vmatpush2.msra.mxu0 0.0
    %348 = vmatprep.mubr.f32.mxu0 0.0
    %349 = vmatmul.mubr.f32.gmra.mxu0 %v282
    %v350 = vpop.f32.mrf.mxu0
    %v351 = vadd.f32 %v46, %v350
    %v352 = vpop.f32.mrf.mxu0
    %353 = vdwg.mxu0
    %354 = vst.msk [vmem:[#allocation7] sm:$0xff] %vm48, %v351
    // Predicated region
    $region22: #{tpu_custom_call.1} parent=1 // pred_check
      _
    $region23: #{tpu_custom_call.1} parent=1 // pred_check_branch
      %356 = sbr.rel (0) target = $region25
    $region24: #{tpu_custom_call.1} parent=1 // pred_region
      %s358 = ssub.s32 128, 128
      %359 = vsyncadd [#allocation4], %s358
      %s361 = sshll.u32 [#allocation7], 4
      %s362 = int_to_ptr.vmem [resolvable:$true] %s361
      %364 = dma.vmem_to_hbm [thread:$0]  %s362, 128, %s3, [#allocation4]
    $region25: #{tpu_custom_call.1} parent=1 // pred_fallthru
      _
    // Predicated region
    $region26: #{tpu_custom_call.1} parent=1 // pred_check
      _
    $region27: #{tpu_custom_call.1} parent=1 // pred_check_branch
      %366 = sbr.rel (0) target = $region29
    $region28: #{tpu_custom_call.1} parent=1 // pred_region
      %367 = dma.done [#allocation4], 128
    $region29: #{tpu_custom_call.1} parent=1 // pred_fallthru
      _
    %368 = vsyncpa [#allocation3], 1
    %369 = vsyncpa [#allocation6], 1
    %370 = vsyncpa [#allocation4], 1

</llo_original>
